<compile_context>
chip_gen: v6e
topology: v6e:2x2x1
jax: 0.10.0
libtpu: 0.0.40
codegen_flags: <defaults>
</compile_context>

<pallas_src>
import functools

import jax
import jax.numpy as jnp
from jax.experimental import pallas as pl
from jax.experimental.pallas import tpu as pltpu


def _round_up(x: int, m: int) -> int:
    return (x + m - 1) // m * m


def _tpu_vmem_capacity_bytes() -> int:
    """Per-core VMEM by generation; conservative (64 MiB) when unknown."""
    try:
        kind = jax.devices()[0].device_kind.lower()
    except Exception:
        return 64 << 20
    if any(tag in kind for tag in ("v4", "v5", "v6")):
        return 128 << 20          # v4 / v5e / v5p / v6e: 128 MiB VMEM per core
    return 64 << 20               # v7x (and unknown): 64 MiB per TensorCore


_VMEM_CAP = _tpu_vmem_capacity_bytes()
# Pipelined working-set budget used for tile selection, and the Mosaic limit.
_TILE_BUDGET = min(_VMEM_CAP * 3 // 8, 56 << 20)   # v7x ~24 MiB, v5e/v6e 48 MiB
_VMEM_LIMIT = min(_VMEM_CAP * 3 // 4, 100 << 20)   # v7x  48 MiB, v5e/v6e 96 MiB


def _patch_embed_kernel(x_ref, w_ref, b_ref, o_ref):
    # x_ref: (tm, K)  patch-row tile (compute dtype, bf16 by default)
    # w_ref: (K, tn)  projection weight (resident: constant index_map when tn==E)
    # b_ref: (1, tn)  f32 bias
    # o_ref: (tm, tn) output tile
    acc = jnp.dot(x_ref[...], w_ref[...], preferred_element_type=jnp.float32)
    o_ref[...] = (acc + b_ref[...]).astype(o_ref.dtype)


def _pick_tiles(m, k, e, in_bytes, out_bytes, budget_bytes, min_steps=8):
    """Pick (tm, tn) for the (cdiv(m, tm), cdiv(e, tn)) grid."""
    k_vm = _round_up(k, 128)      # lane-padded VMEM footprint (HBM stays unpadded)
    e_vm = _round_up(e, 128)

    # Split E only when the weight slab cannot sit resident next to a useful
    # row tile; otherwise an E split just re-streams the weight per row tile.
    tn = e
    if 2 * k_vm * e_vm * in_bytes > budget_bytes // 2:
        for cand in (512, 256):
            if e % cand == 0:
                tn = cand
                break
    tn_vm = _round_up(tn, 128)

    align = 16                    # covers f32 (8) and bf16 (16) sublane packing
    m_al = _round_up(max(m, 1), align)
    # Cap the row tile so the grid keeps >= ~min_steps steps (>= 2 whenever M
    # allows): gives the pipeline overlap and both v7x TensorCores work.
    cap = max(align, _round_up(pl.cdiv(m, min_steps), align))

    tm = align
    for cand in (2048, 1024, 512, 256, 128, 64, 32, 16):
        if cand > m_al:
            continue
        need = (2 * cand * k_vm * in_bytes        # double-buffered x tile
                + 2 * cand * tn_vm * out_bytes    # double-buffered out tile
                + 2 * k_vm * tn_vm * in_bytes     # weight buffers (resident)
                + 4 * tn_vm * 4)                  # bias buffers
        if need <= budget_bytes:
            tm = cand
            break
    return min(tm, cap), tn


def prepare_patch_embed_params(weight, bias, compute_dtype=jnp.bfloat16):
    """One-time parameter prep (hoisted out of the per-step forward pass).

    weight: (E, C, P, P) Conv2d weight, bias: (E,).
    Returns (w2d, b2d): a (K, E) matmul weight in the compute dtype and a
    (1, E) f32 bias.  Use compute_dtype=jnp.float32 for the exact-f32 path.
    """
    E = weight.shape[0]
    K = weight.shape[1] * weight.shape[2] * weight.shape[3]
    w2d = jnp.asarray(weight).reshape(E, K).T.astype(compute_dtype)   # (K, E)
    b2d = jnp.asarray(bias).astype(jnp.float32).reshape(1, E)
    return w2d, b2d


@functools.partial(jax.jit, static_argnames=("patch_size", "out_dtype"))
def patch_embed(x, w2d, b2d, *, patch_size, out_dtype=None):
    """PatchEmbed forward.

    x: (N, C, H, W) NCHW.  w2d/b2d: from prepare_patch_embed_params.
    Returns (N, num_patches, E) with num_patches = (H // P) * (W // P),
    matching PyTorch conv(stride=P) -> flatten(2) -> transpose(1, 2);
    norm_layer=None -> Identity.  out_dtype defaults to x.dtype (pass
    jnp.bfloat16 when downstream accepts it to halve the writeback).
    """
    N, C, H, W = x.shape
    ph, pw = (patch_size, patch_size) if isinstance(patch_size, int) else tuple(patch_size)
    assert H % ph == 0 and W % pw == 0, "image size must match the patch grid"
    Gh, Gw = H // ph, W // pw
    num_patches = Gh * Gw
    K, E = w2d.shape
    assert K == C * ph * pw, "weight does not match input channels/patch size"

    out_dtype = jnp.dtype(out_dtype) if out_dtype is not None else x.dtype
    cdt = w2d.dtype
    M = N * num_patches

    # Cast to the (bf16 by default) compute dtype BEFORE the im2col relayout
    # so the transpose pass / input DMAs move half the bytes.
    x = x.astype(cdt)
    # im2col: (N, C, Gh, P, Gw, P) -> (N, Gh, Gw, C, P, P) -> (M, K); column
    # order (C, kh, kw) matches the flattened Conv2d weight.
    # TODO(synk): confirm in the HLO/profile that this relayout fuses into the
    # pallas_call input DMA (allow_input_fusion); if it materializes, it is at
    # least a half-width (bf16) pass now.
    patches = x.reshape(N, C, Gh, ph, Gw, pw)
    patches = jnp.transpose(patches, (0, 2, 4, 1, 3, 5)).reshape(M, K)

    in_bytes = jnp.dtype(cdt).itemsize
    out_bytes = jnp.dtype(out_dtype).itemsize
    tm, tn = _pick_tiles(M, K, E, in_bytes, out_bytes, _TILE_BUDGET)
    grid = (pl.cdiv(M, tm), pl.cdiv(E, tn))

    cost = pl.CostEstimate(
        flops=2 * M * K * E,
        transcendentals=0,
        bytes_accessed=(M * K * in_bytes + K * E * in_bytes
                        + E * 4 + M * E * out_bytes),
    )

    out2d = pl.pallas_call(
        _patch_embed_kernel,
        out_shape=jax.ShapeDtypeStruct((M, E), out_dtype),
        grid_spec=pltpu.PrefetchScalarGridSpec(
            num_scalar_prefetch=0,
            grid=grid,
            in_specs=[
                pl.BlockSpec((tm, K), lambda i, j: (i, 0)),
                pl.BlockSpec((K, tn), lambda i, j: (0, j)),
                pl.BlockSpec((1, tn), lambda i, j: (0, j)),
            ],
            out_specs=pl.BlockSpec((tm, tn), lambda i, j: (i, j)),
        ),
        compiler_params=pltpu.CompilerParams(
            dimension_semantics=("parallel", "parallel"),
            vmem_limit_bytes=_VMEM_LIMIT,
            # Best effort: let XLA fuse the im2col relayout / casts into the
            # pallas_call input DMAs instead of a separate HBM pass.
            allow_input_fusion=[True, True, True],
        ),
        cost_estimate=cost,
    )(patches, w2d, b2d)

    # (M, E) == (N*num_patches, E): contiguous, reshape is free metadata.
    return out2d.reshape(N, num_patches, E)


def reference_patch_embed(x, weight, bias, patch_size):
    """Pure-JAX reference: strided conv == patch matmul (for verification)."""
    out = jax.lax.conv_general_dilated(
        x, weight,
        window_strides=(patch_size, patch_size),
        padding="VALID",
        dimension_numbers=("NCHW", "OIHW", "NCHW"),
    ) + bias.reshape(1, -1, 1, 1)
    N, E, Gh, Gw = out.shape
    return jnp.transpose(out.reshape(N, E, Gh * Gw), (0, 2, 1))


if __name__ == "__main__":
    # Small shapes consistent with the module: img_size=16, patch_size=4,
    # in_channels=4, embed_dim=32  ->  num_patches = 16.
    N, C, H, W = 2, 4, 16, 16
    P = 4
    E = 32

    key = jax.random.PRNGKey(0)
    kx, kw, kb = jax.random.split(key, 3)
    x = jax.random.normal(kx, (N, C, H, W), dtype=jnp.float32)
    # Deterministic synthetic parameters (no checkpoint load).
    weight = 0.02 * jax.random.normal(kw, (E, C, P, P), dtype=jnp.float32)
    bias = 0.01 * jax.random.normal(kb, (E,), dtype=jnp.float32)

    ref = reference_patch_embed(x, weight, bias, P)

    # Exact f32-operand path: bit-accurate against the conv reference.
    w32, b32 = prepare_patch_embed_params(weight, bias, compute_dtype=jnp.float32)
    out_f32 = jax.block_until_ready(patch_embed(x, w32, b32, patch_size=P))
    assert out_f32.shape == (N, (H // P) * (W // P), E), out_f32.shape
    assert jnp.allclose(out_f32, ref, atol=1e-5, rtol=1e-5), float(
        jnp.max(jnp.abs(out_f32 - ref)))

    # Default bf16-operand path (f32 accumulate + f32 bias): the fast,
    # memory-bound-friendly variant on v5e/v6e/v7x.
    wbf, bbf = prepare_patch_embed_params(weight, bias)
    out_bf16 = jax.block_until_ready(patch_embed(x, wbf, bbf, patch_size=P))
    assert out_bf16.shape == (N, (H // P) * (W // P), E), out_bf16.shape
    assert jnp.allclose(out_bf16, ref, atol=3e-2, rtol=3e-2), float(
        jnp.max(jnp.abs(out_bf16 - ref)))

    print("KERNEL_OK")
</pallas_src>

<mosaic_0001>
module attributes {stable_mosaic.version = 11 : i64} {
  func.func @_patch_embed_kernel(%arg0: i32, %arg1: i32, %arg2: memref<16x64xf32, #tpu.memory_space<vmem>>, %arg3: memref<64x32xf32, #tpu.memory_space<vmem>>, %arg4: memref<1x32xf32, #tpu.memory_space<vmem>>, %arg5: memref<16x32xf32, #tpu.memory_space<vmem>>) attributes {dimension_semantics = [#tpu.dimension_semantics<parallel>, #tpu.dimension_semantics<parallel>], iteration_bounds = array<i64: 2, 1>, scalar_prefetch = 0 : i64, scratch_operands = 0 : i64, tpu.core_type = #tpu.core_type<tc>, window_params = [{transform_indices = @transform_0, window_bounds = array<i64: 16, 64>}, {transform_indices = @transform_1, window_bounds = array<i64: 64, 32>}, {transform_indices = @transform_2, window_bounds = array<i64: 1, 32>}, {transform_indices = @transform_3, window_bounds = array<i64: 16, 32>}]} {
    %c0 = arith.constant 0 : index
    %c0_0 = arith.constant 0 : index
    %0 = vector.load %arg2[%c0, %c0_0] : memref<16x64xf32, #tpu.memory_space<vmem>>, vector<16x64xf32>
    %c0_1 = arith.constant 0 : index
    %c0_2 = arith.constant 0 : index
    %1 = vector.load %arg3[%c0_1, %c0_2] : memref<64x32xf32, #tpu.memory_space<vmem>>, vector<64x32xf32>
    %cst = arith.constant dense<0.000000e+00> : vector<16x32xf32>
    %2 = tpu.matmul %0, %1, %cst {dimension_numbers = #tpu.dot_dimension_numbers<[1], [0], [0], [1], [0, 0, 1, 1], [], []>} : vector<16x64xf32>, vector<64x32xf32>, vector<16x32xf32> -> vector<16x32xf32>
    %c0_3 = arith.constant 0 : index
    %c0_4 = arith.constant 0 : index
    %3 = vector.load %arg4[%c0_3, %c0_4] : memref<1x32xf32, #tpu.memory_space<vmem>>, vector<1x32xf32>
    %4 = vector.broadcast %3 : vector<1x32xf32> to vector<16x32xf32>
    %5 = arith.addf %2, %4 : vector<16x32xf32>
    %c0_5 = arith.constant 0 : index
    %c0_6 = arith.constant 0 : index
    %6 = vector.load %arg5[%c0_5, %c0_6] : memref<16x32xf32, #tpu.memory_space<vmem>>, vector<16x32xf32>
    tpu.vector_store %arg5[%c0_5, %c0_6], %5 {strides = array<i32>} : memref<16x32xf32, #tpu.memory_space<vmem>>, vector<16x32xf32>,
    return
  }
  func.func @transform_0(%arg0: i32, %arg1: i32) -> (i32, i32) {
    %c0_i32 = arith.constant 0 : i32
    %c0_i32_0 = arith.constant 0 : i32
    return %arg0, %c0_i32 : i32, i32
  }
  func.func @transform_1(%arg0: i32, %arg1: i32) -> (i32, i32) {
    %c0_i32 = arith.constant 0 : i32
    %c0_i32_0 = arith.constant 0 : i32
    return %c0_i32, %arg1 : i32, i32
  }
  func.func @transform_2(%arg0: i32, %arg1: i32) -> (i32, i32) {
    %c0_i32 = arith.constant 0 : i32
    %c0_i32_0 = arith.constant 0 : i32
    return %c0_i32, %arg1 : i32, i32
  }
  func.func @transform_3(%arg0: i32, %arg1: i32) -> (i32, i32) {
    %c0_i32 = arith.constant 0 : i32
    return %arg0, %arg1 : i32, i32
  }
}

</mosaic_0001>

<llo_original>
// kernel: patch_embed.1
$region0: #{patch_embed.1}
  #allocation0 [shape = 'u32[]', space=smem, size = 0x4, offset = 0x4, fixed_abs, tag = 'smem constant byte address 0x4 - core index']
  #allocation1 [shape = 'u32[144,128]{1,0:T(1,128)}', space=vmem, size = 0x12000, scoped, tag = 'internal scratch']
  %s0 = inlined_call_operand.vmem [shape: f32[32,64], index: 0, kind: input, shape index: {}]
  %s1 = inlined_call_operand.vmem [shape: f32[64,32], index: 1, kind: input, shape index: {}]
  %s2 = inlined_call_operand.vmem [shape: f32[1,32], index: 2, kind: input, shape index: {}]
  %s3 = inlined_call_operand.hbm [shape: f32[32,32], index: 3, kind: output, shape index: {}]
  %s4 = sld [smem:[#allocation0]]
  $region45: #{patch_embed.1} parent=0
    _
  %s6 = ssub.s32 1, %s4
  %s7 = scalar_select 0, %s6, %s4
  $region1: #{patch_embed.1} parent=0
    #allocation2 [shape = 'u8[16384]{0}', space=vmem, size = 0x4000, scoped, tag = 'output window, operand 0']
    #allocation3 [shape = 's32[2]{0}', space=sflag, size = 0x8, scoped, tag = 'scoped memory for patch_embed.1']
    %8 = vsyncpa [#allocation3], 0
    %s9 = scalar_lea.sflag [#allocation3], 1
    %10 = vsyncpa %s9, 0
    loop: start=0, step=1, limit=4
    $region2: #{patch_embed.1} parent=1 // loop_pre_header
      _
    $region3: #{patch_embed.1} parent=1 // loop_header
      %s12 = sphi 0, %s16
      %p13 = scmp.ge.s32.totalorder %s12, 4
      %s19 = sphi 0, %s31
      %s20 = sphi 0, %s27
      %s21 = sphi 0, %s19
      %s22 = sphi 0, %s20
      %s23 = sphi 0, %s21
      %s24 = sphi 0, %s22
      %s34 = sphi 0, %s36
      %s37 = sphi 0, %s34
      %s38 = sphi 0, %s37
      %s54 = sphi 0, %s38
      %s60 = sphi 0, %s62
      %s63 = sphi 0, %s60
      %s64 = sphi 0, %s63
      %s80 = sphi 0, %s64
      %s86 = sphi 0, %s88
      %s89 = sphi 0, %s86
      %s90 = sphi 0, %s89
      %s106 = sphi 0, %s90
      %s114 = sphi 0, %s116
      %s117 = sphi 0, %s114
      %s118 = sphi 0, %s117
      %s134 = sphi 0, %s118
    $region4: #{patch_embed.1} parent=1 // loop_header_branch
      %15 = sbr.rel (%p13) target = $region8
    $region5: #{patch_embed.1} parent=1 // loop_body
      %s17 = ssub.s32 %s12, 1
      %s18 = ssub.s32 %s12, 2
      %s25 = sadd.s32 1, %s20
      %p26 = scmp.ge.s32.totalorder %s25, 1
      %s27 = scalar_select %p26, 0, %s25
      %s28 = sadd.s32 1, %s19
      %s29 = scalar_select %p26, %s28, %s19
      %p30 = scmp.ge.s32.totalorder %s29, 2
      %s31 = scalar_select %p30, 0, %s29
      %s32 = ssub.s32 %s19, %s31
      %p33 = scmp.eq.s32.totalorder %s32, 0
      %s35 = sadd.s32 %s34, 1
      %s36 = scalar_select %p33, %s34, %s35
      %p39 = pneg %p33
      %p40 = scmp.eq.s32.totalorder %s12, 1
      %p41 = por %p39, %p40
      %p42 = scmp.ne.s32.totalorder %s34, %s37
      %p43 = scmp.eq.s32.totalorder %s12, 0
      %p44 = por %p42, %p43
      %p45 = scmp.ne.s32.totalorder %s34, %s37
      %p46 = scmp.eq.s32.totalorder %s17, 1
      %p47 = por %p45, %p46
      %p48 = scmp.ne.s32.totalorder %s37, %s38
      %p49 = scmp.eq.s32.totalorder %s17, 0
      %p50 = por %p48, %p49
      %p51 = scmp.ne.s32.totalorder %s37, %s38
      %p52 = scmp.eq.s32.totalorder %s18, 1
      %p53 = por %p51, %p52
      %p55 = scmp.ne.s32.totalorder %s38, %s54
      %p56 = scmp.eq.s32.totalorder %s18, 0
      %p57 = por %p55, %p56
      %s58 = ssub.s32 %s20, %s27
      %p59 = scmp.eq.s32.totalorder %s58, 0
      %s61 = sadd.s32 %s60, 1
      %s62 = scalar_select %p59, %s60, %s61
      %p65 = pneg %p59
      %p66 = scmp.eq.s32.totalorder %s12, 1
      %p67 = por %p65, %p66
      %p68 = scmp.ne.s32.totalorder %s60, %s63
      %p69 = scmp.eq.s32.totalorder %s12, 0
      %p70 = por %p68, %p69
      %p71 = scmp.ne.s32.totalorder %s60, %s63
      %p72 = scmp.eq.s32.totalorder %s17, 1
      %p73 = por %p71, %p72
      %p74 = scmp.ne.s32.totalorder %s63, %s64
      %p75 = scmp.eq.s32.totalorder %s17, 0
      %p76 = por %p74, %p75
      %p77 = scmp.ne.s32.totalorder %s63, %s64
      %p78 = scmp.eq.s32.totalorder %s18, 1
      %p79 = por %p77, %p78
      %p81 = scmp.ne.s32.totalorder %s64, %s80
      %p82 = scmp.eq.s32.totalorder %s18, 0
      %p83 = por %p81, %p82
      %s84 = ssub.s32 %s20, %s27
      %p85 = scmp.eq.s32.totalorder %s84, 0
      %s87 = sadd.s32 %s86, 1
      %s88 = scalar_select %p85, %s86, %s87
      %p91 = pneg %p85
      %p92 = scmp.eq.s32.totalorder %s12, 1
      %p93 = por %p91, %p92
      %p94 = scmp.ne.s32.totalorder %s86, %s89
      %p95 = scmp.eq.s32.totalorder %s12, 0
      %p96 = por %p94, %p95
      %p97 = scmp.ne.s32.totalorder %s86, %s89
      %p98 = scmp.eq.s32.totalorder %s17, 1
      %p99 = por %p97, %p98
      %p100 = scmp.ne.s32.totalorder %s89, %s90
      %p101 = scmp.eq.s32.totalorder %s17, 0
      %p102 = por %p100, %p101
      %p103 = scmp.ne.s32.totalorder %s89, %s90
      %p104 = scmp.eq.s32.totalorder %s18, 1
      %p105 = por %p103, %p104
      %p107 = scmp.ne.s32.totalorder %s90, %s106
      %p108 = scmp.eq.s32.totalorder %s18, 0
      %p109 = por %p107, %p108
      %s110 = ssub.s32 %s19, %s31
      %s111 = ssub.s32 %s20, %s27
      %s112 = sor.u32 %s110, %s111
      %p113 = scmp.eq.s32.totalorder %s112, 0
      %s115 = sadd.s32 %s114, 1
      %s116 = scalar_select %p113, %s114, %s115
      %p119 = pneg %p113
      %p120 = scmp.eq.s32.totalorder %s12, 1
      %p121 = por %p119, %p120
      %p122 = scmp.ne.s32.totalorder %s114, %s117
      %p123 = scmp.eq.s32.totalorder %s12, 0
      %p124 = por %p122, %p123
      %p125 = scmp.ne.s32.totalorder %s114, %s117
      %p126 = scmp.eq.s32.totalorder %s17, 1
      %p127 = por %p125, %p126
      %p128 = scmp.ne.s32.totalorder %s117, %s118
      %p129 = scmp.eq.s32.totalorder %s17, 0
      %p130 = por %p128, %p129
      %p131 = scmp.ne.s32.totalorder %s117, %s118
      %p132 = scmp.eq.s32.totalorder %s18, 1
      %p133 = por %p131, %p132
      %p135 = scmp.ne.s32.totalorder %s118, %s134
      %p136 = scmp.eq.s32.totalorder %s18, 0
      %p137 = por %p135, %p136
      %p138 = scmp.le.s32.totalorder 1, %s12
      %p139 = scmp.lt.s32.totalorder %s12, 3
      %p140 = pnand %p138, %p139
      %p141 = pneg %p140
      // Predicated region
      $region9: #{patch_embed.1} parent=5 // pred_check
        _
      $region10: #{patch_embed.1} parent=5 // pred_check_branch
        %143 = sbr.rel (%p140) target = $region12
      $region11: #{patch_embed.1} parent=5 // pred_region
        %s144 = ssub.s32 %s12, 1
        // Predicated region
        $region13: #{patch_embed.1} parent=11 // pred_check
          %p145 = pneg %p76
        $region14: #{patch_embed.1} parent=11 // pred_check_branch
          %147 = sbr.rel (%p145) target = $region16
        $region15: #{patch_embed.1} parent=11 // pred_region
          %p148 = scmp.lt.s32.totalorder %s22, 0
          %s149 = scalar_select %p148, %s22, 0
          %s150 = smul.addr %s149, 8
          %s151 = scalar_lea.vmem %s1, %s150
        $region16: #{patch_embed.1} parent=11 // pred_fallthru
          _
        // Predicated region
        $region17: #{patch_embed.1} parent=11 // pred_check
          %p152 = pneg %p102
        $region18: #{patch_embed.1} parent=11 // pred_check_branch
          %154 = sbr.rel (%p152) target = $region20
        $region19: #{patch_embed.1} parent=11 // pred_region
          %p155 = scmp.lt.s32.totalorder %s22, 0
          %s156 = scalar_select %p155, %s22, 0
          %s157 = scalar_lea.vmem %s2, %s156
        $region20: #{patch_embed.1} parent=11 // pred_fallthru
          _
      $region12: #{patch_embed.1} parent=5 // pred_fallthru
        _
      %p158 = scmp.lt.s32.totalorder %s12, 2
      // Predicated region
      $region21: #{patch_embed.1} parent=5 // pred_check
        %p159 = pneg %p158
      $region22: #{patch_embed.1} parent=5 // pred_check_branch
        %161 = sbr.rel (%p159) target = $region24
      $region23: #{patch_embed.1} parent=5 // pred_region
        // Predicated region
        $region25: #{patch_embed.1} parent=23 // pred_check
          %p162 = pneg %p44
        $region26: #{patch_embed.1} parent=23 // pred_check_branch
          %164 = sbr.rel (%p162) target = $region28
        $region27: #{patch_embed.1} parent=23 // pred_region
          %s165 = smul.u32 2, %s19
          %p166 = scmp.lt.s32.totalorder %s165, 3
          %s167 = scalar_select %p166, %s165, 3
          %s168 = smul.addr %s167, 8
          %s169 = scalar_lea.vmem %s0, %s168
          %s170 = smul.u32 2, %s19
        $region28: #{patch_embed.1} parent=23 // pred_fallthru
          _
      $region24: #{patch_embed.1} parent=5 // pred_fallthru
        _
      %p171 = scmp.le.s32.totalorder 1, %s12
      %p172 = scmp.lt.s32.totalorder %s12, 3
      %p173 = pnand %p171, %p172
      %p174 = pneg %p173
      // Predicated region
      $region29: #{patch_embed.1} parent=5 // pred_check
        _
      $region30: #{patch_embed.1} parent=5 // pred_check_branch
        %176 = sbr.rel (%p173) target = $region32
      $region31: #{patch_embed.1} parent=5 // pred_region
        %s177 = ssub.s32 %s12, 1
        %s178 = smul.u32 2, %s21
        %p179 = scmp.lt.s32.totalorder %s178, 3
        %s180 = scalar_select %p179, %s178, 3
        %s181 = smul.addr %s180, 8
        %s182 = scalar_lea.vmem %s0, %s181
        %p183 = pneg %p50
        %p184 = pneg %p47
        %p185 = scmp.lt.s32.totalorder %s22, 0
        %s186 = scalar_select %p185, %s22, 0
        %s187 = smul.addr %s186, 8
        %s188 = scalar_lea.vmem %s1, %s187
        %p189 = pneg %p76
        %p190 = pneg %p73
        %p191 = scmp.lt.s32.totalorder %s22, 0
        %s192 = scalar_select %p191, %s22, 0
        %s193 = scalar_lea.vmem %s2, %s192
        %p194 = pneg %p102
        %p195 = pneg %p99
        %p196 = pneg %p130
        %p197 = pneg %p127
        %s198 = sand.u32 %s117, 1
        %s199 = scalar_lea.sflag [#allocation3], %s198
        %s200 = sand.u32 %s117, 1
        %s201 = smul.addr %s200, 16
        %s202 = scalar_lea.vmem [#allocation2], %s201
        %s203 = smul.u32 2, %s21
        %p204 = scmp.lt.s32.totalorder %s203, 3
        %s205 = scalar_select %p204, %s203, 3
        %s206 = smul.addr %s205, 8
        %s207 = scalar_lea.vmem %s0, %s206
        %s208 = smul.u32 2, %s21
        %p209 = scmp.lt.s32.totalorder %s22, 0
        %s210 = scalar_select %p209, %s22, 0
        %s211 = smul.addr %s210, 8
        %s212 = scalar_lea.vmem %s1, %s211
        %p213 = scmp.lt.s32.totalorder %s22, 0
        %s214 = scalar_select %p213, %s22, 0
        %s215 = scalar_lea.vmem %s2, %s214
        %s216 = smul.u32 2, %s21
        %v217 = vld [vmem:[%s207] sm:$0xff]
        %v218 = vld [vmem:[%s207 + $0x8] sm:$0xff]
        %v219 = vld [vmem:[%s212] sm:$0xff]
        %v220 = vld [vmem:[%s212 + $0x8] sm:$0xff]
        %v221 = vld [vmem:[%s212 + $0x10] sm:$0xff]
        %v222 = vld [vmem:[%s212 + $0x18] sm:$0xff]
        %v223 = vld [vmem:[%s212 + $0x20] sm:$0xff]
        %v224 = vld [vmem:[%s212 + $0x28] sm:$0xff]
        %v225 = vld [vmem:[%s212 + $0x30] sm:$0xff]
        %v226 = vld [vmem:[%s212 + $0x38] sm:$0xff]
        %v227 = vld [vmem:[%s215] sm:$0x1]
        %v229 = vlaneseq
        %v230 = vshrl.u32 %v229, 7
        %v231 = vsub.s32 0, %v230
        %v232 = vrot.slane %v227, %v231
        %vm234 = vcmask 523264
        %v236 = vsel %vm234, %v217, 0
        %v239 = vsel %vm234, %v218, 0
        %241 = vmatprep.subr.mxu0 0.0
        %242 = vmatpush1.msra.mxu0 0.0
        %243 = vmatprep.subr.mxu0 0.0
        %244 = vmatpush1.msra.mxu0 0.0
        %245 = vmatprep.subr.mxu0 0.0
        %246 = vmatpush1.msra.mxu0 0.0
        %247 = vmatprep.subr.mxu0 0.0
        %248 = vmatpush1.msra.mxu0 0.0
        %249 = vmatprep.subr.mxu0 0.0
        %250 = vmatpush1.msra.mxu0 0.0
        %251 = vmatprep.subr.mxu0 0.0
        %252 = vmatpush1.msra.mxu0 0.0
        %253 = vmatprep.subr.mxu0 0.0
        %254 = vmatpush1.msra.mxu0 0.0
        %255 = vmatprep.subr.mxu0 0.0
        %256 = vmatpush1.msra.mxu0 0.0
        %257 = vmatprep.subr.mxu0 0.0
        %258 = vmatpush1.msra.mxu0 %v226
        %259 = vmatprep.subr.mxu0 0.0
        %260 = vmatpush1.msra.mxu0 %v225
        %261 = vmatprep.subr.mxu0 0.0
        %262 = vmatpush1.msra.mxu0 %v224
        %263 = vmatprep.subr.mxu0 0.0
        %264 = vmatpush1.msra.mxu0 %v223
        %265 = vmatprep.subr.mxu0 0.0
        %266 = vmatpush1.msra.mxu0 %v222
        %267 = vmatprep.subr.mxu0 0.0
        %268 = vmatpush1.msra.mxu0 %v221
        %269 = vmatprep.subr.mxu0 0.0
        %270 = vmatpush1.msra.mxu0 %v220
        %271 = vmatprep.subr.mxu0 0.0
        %272 = vmatpush1.msra.mxu0 %v219
        %273 = vmatprep.subr.mxu0 0.0
        %274 = vmatpush2.msra.mxu0 0.0
        %275 = vmatprep.subr.mxu0 0.0
        %276 = vmatpush2.msra.mxu0 0.0
        %277 = vmatprep.subr.mxu0 0.0
        %278 = vmatpush2.msra.mxu0 0.0
        %279 = vmatprep.subr.mxu0 0.0
        %280 = vmatpush2.msra.mxu0 0.0
        %281 = vmatprep.subr.mxu0 0.0
        %282 = vmatpush2.msra.mxu0 0.0
        %283 = vmatprep.subr.mxu0 0.0
        %284 = vmatpush2.msra.mxu0 0.0
        %285 = vmatprep.subr.mxu0 0.0
        %286 = vmatpush2.msra.mxu0 0.0
        %287 = vmatprep.subr.mxu0 0.0
        %288 = vmatpush2.msra.mxu0 0.0
        %289 = vmatprep.subr.mxu0 0.0
        %290 = vmatpush2.msra.mxu0 0.0
        %291 = vmatprep.subr.mxu0 0.0
        %292 = vmatpush2.msra.mxu0 0.0
        %293 = vmatprep.subr.mxu0 0.0
        %294 = vmatpush2.msra.mxu0 0.0
        %295 = vmatprep.subr.mxu0 0.0
        %296 = vmatpush2.msra.mxu0 0.0
        %297 = vmatprep.subr.mxu0 0.0
        %298 = vmatpush2.msra.mxu0 0.0
        %299 = vmatprep.subr.mxu0 0.0
        %300 = vmatpush2.msra.mxu0 0.0
        %301 = vmatprep.subr.mxu0 0.0
        %302 = vmatpush2.msra.mxu0 0.0
        %303 = vmatprep.subr.mxu0 0.0
        %304 = vmatpush2.msra.mxu0 0.0
        %305 = vmatprep.mubr.f32.mxu0 0.0
        %306 = vmatmul.mubr.f32.gmra.mxu0 %v236
        %v307 = vpop.f32.mrf.mxu0
        %v308 = vadd.f32 %v232, %v307
        %v309 = vpop.f32.mrf.mxu0
        %310 = vmatprep.mubr.f32.mxu0 0.0
        %311 = vmatmul.mubr.f32.gmra.mxu0 %v239
        %v312 = vpop.f32.mrf.mxu0
        %v313 = vadd.f32 %v232, %v312
        %v314 = vpop.f32.mrf.mxu0
        %315 = vdwg.mxu0
        %vm316 = vcmask 261120
        %317 = vst.msk [vmem:[%s202] sm:$0xff] %vm316, %v308
        %318 = vst.msk [vmem:[%s202 + $0x8] sm:$0xff] %vm316, %v313
        %s319 = sand.u32 %s117, 1
        %s320 = scalar_lea.sflag [#allocation3], %s319
        %s321 = sand.u32 %s117, 1
        %s322 = smul.addr %s321, 16
        %s323 = scalar_lea.vmem [#allocation2], %s322
        // Predicated region
        $region33: #{patch_embed.1} parent=31 // pred_check
          %p324 = pneg %p127
        $region34: #{patch_embed.1} parent=31 // pred_check_branch
          %326 = sbr.rel (%p324) target = $region36
        $region35: #{patch_embed.1} parent=31 // pred_region
          %s327 = smul.u32 2, %s21
          %s329 = ssub.s32 256, 256
          %330 = vsyncadd %s320, %s329
          %s331 = sadd.s32 %s22, %s327
          %s332 = smul.addr %s331, 128
          %s333 = scalar_lea.hbm %s3, %s332
          %s334 = sshll.u32 %s323, 4
          %s335 = int_to_ptr.vmem [resolvable:$true] %s334
          %340 = dma.vmem_to_hbm [thread:$0]  %s335, 256, %s333, %s320, 128, 128, 8
        $region36: #{patch_embed.1} parent=31 // pred_fallthru
          _
      $region32: #{patch_embed.1} parent=5 // pred_fallthru
        _
      %p341 = scmp.le.s32.totalorder 2, %s12
      // Predicated region
      $region37: #{patch_embed.1} parent=5 // pred_check
        %p342 = pneg %p341
      $region38: #{patch_embed.1} parent=5 // pred_check_branch
        %344 = sbr.rel (%p342) target = $region40
      $region39: #{patch_embed.1} parent=5 // pred_region
        %s345 = ssub.s32 %s12, 2
        // Predicated region
        $region41: #{patch_embed.1} parent=39 // pred_check
          %p346 = pneg %p133
        $region42: #{patch_embed.1} parent=39 // pred_check_branch
          %348 = sbr.rel (%p346) target = $region44
        $region43: #{patch_embed.1} parent=39 // pred_region
          %s349 = sand.u32 %s118, 1
          %s350 = scalar_lea.sflag [#allocation3], %s349
          %s351 = sand.u32 %s118, 1
          %s352 = smul.addr %s351, 16
          %s353 = scalar_lea.vmem [#allocation2], %s352
          %354 = dma.done %s350, 256
        $region44: #{patch_embed.1} parent=39 // pred_fallthru
          _
      $region40: #{patch_embed.1} parent=5 // pred_fallthru
        _
    $region6: #{patch_embed.1} parent=1 // loop_footer
      %s16 = sadd.s32 1, %s12
    $region7: #{patch_embed.1} parent=1 // loop_footer_branch
      %11 = sbr.rel target = $region3
    $region8: #{patch_embed.1} parent=1 // loop_exit
      _
    %355 = vsyncpa [#allocation3], 1
    %s356 = scalar_lea.sflag [#allocation3], 1
    %357 = vsyncpa %s356, 1

</llo_original>
